<compile_context>
chip_gen: v6e
topology: v6e:2x2x1
jax: 0.10.0
libtpu: 0.0.40
codegen_flags: <defaults>
</compile_context>

<pallas_src>
import functools

import jax
import jax.numpy as jnp
from jax import lax
from jax.experimental import pallas as pl
from jax.experimental.pallas import tpu as pltpu


def _conv3x3_kernel(xw_ref, w_ref, ml_ref, mr_ref, o_ref, col_ref, *, Cp, TH, W):
    """One output tile: (E, TH*W) = w2 (E, 9*Cp) @ im2col (9*Cp, TH*W)."""
    M = TH * W
    mask_left = ml_ref[...]    # (1, M): zero where out-col == 0     (kx == 0 taps)
    mask_right = mr_ref[...]   # (1, M): zero where out-col == W - 1 (kx == 2 taps)

    # Assemble the im2col operand in VMEM scratch: rows [t*Cp, (t+1)*Cp) hold the
    # lane-shifted window of tap t = ky*3 + kx (channel-padded to Cp, so every
    # store starts at an 8-aligned sublane offset and covers full rows).
    for ky in range(3):
        for kx in range(3):
            t = ky * 3 + kx
            off = ky * W + kx                       # static lane offset of this tap
            tap = xw_ref[0, 0, :, off:off + M]      # (Cp, M)
            if kx == 0:
                tap = tap * mask_left
            elif kx == 2:
                tap = tap * mask_right
            col_ref[t * Cp:(t + 1) * Cp, :] = tap

    # Single fused-K matmul on the MXU, f32 accumulation, lane-dense store.
    o_ref[0] = jnp.dot(
        w_ref[...], col_ref[...], preferred_element_type=jnp.float32
    ).astype(o_ref.dtype)


def _pick_row_tile(H, W, max_tile_elems):
    """Largest TH dividing H with TH*W a multiple of 128 and <= max_tile_elems."""
    best = None
    for th in range(1, H + 1):
        if H % th:
            continue
        m = th * W
        if m > max_tile_elems:
            break
        if m % 128 == 0:
            best = th
    if best is None:
        best = H  # single row tile: the block's last dim equals the full H*W (legal)
    return best


def overlap_patch_embed(x_nchw, weight_oihw, *, compute_dtype=jnp.bfloat16,
                        max_tile_elems=16384):
    """Equivalent of OverlapPatchEmbed.forward: Conv2d(k=3, s=1, p=1, bias=False)."""
    N, C, H, W = x_nchw.shape
    E = weight_oihw.shape[0]
    assert weight_oihw.shape == (E, C, 3, 3)

    Cp = ((C + 7) // 8) * 8            # channel count padded to a sublane multiple
    TH = _pick_row_tile(H, W, max_tile_elems)
    nH = H // TH
    M = TH * W                         # flattened spatial size of one output tile
    Lw = (TH + 2) * W + 2              # flattened window: TH+2 rows + 1-elem halo

    # ---- input repack (cheap, plain-XLA glue on the small C-channel input) ----
    # channel-pad to Cp, zero-pad height by 1 row each side, flatten spatial,
    # pad the flat axis by 1 element each side, then cut overlapping row-tile windows.
    xp = jnp.pad(x_nchw, ((0, 0), (0, Cp - C), (1, 1), (0, 0)))            # (N,Cp,H+2,W)
    xf = jnp.pad(xp.reshape(N, Cp, (H + 2) * W), ((0, 0), (0, 0), (1, 1)))  # (N,Cp,(H+2)*W+2)
    xw = jnp.stack(
        [xf[:, :, i * TH * W: i * TH * W + Lw] for i in range(nH)], axis=1
    ).astype(compute_dtype)                                                # (N,nH,Cp,Lw)

    # weights: (E,C,3,3) -> (E,3,3,C) -> (E,9,Cp) -> (E, 9*Cp), tap-major / channel-minor
    w2 = jnp.transpose(weight_oihw, (0, 2, 3, 1)).reshape(E, 9, C)
    w2 = jnp.pad(w2, ((0, 0), (0, 0), (0, Cp - C))).reshape(E, 9 * Cp)
    w2 = w2.astype(compute_dtype)

    # Width-boundary masks (flat column index within a row).
    col = jnp.arange(M, dtype=jnp.int32) % W
    mask_l = (col != 0).reshape(1, M).astype(compute_dtype)
    mask_r = (col != W - 1).reshape(1, M).astype(compute_dtype)

    kernel = functools.partial(_conv3x3_kernel, Cp=Cp, TH=TH, W=W)

    out_flat = pl.pallas_call(
        kernel,
        out_shape=jax.ShapeDtypeStruct((N, E, H * W), x_nchw.dtype),
        grid=(N, nH),
        in_specs=[
            pl.BlockSpec((1, 1, Cp, Lw), lambda n, i: (n, i, 0, 0)),
            pl.BlockSpec((E, 9 * Cp), lambda n, i: (0, 0)),
            pl.BlockSpec((1, M), lambda n, i: (0, 0)),
            pl.BlockSpec((1, M), lambda n, i: (0, 0)),
        ],
        out_specs=pl.BlockSpec((1, E, M), lambda n, i: (n, 0, i)),
        scratch_shapes=[pltpu.VMEM((9 * Cp, M), compute_dtype)],
        compiler_params=pltpu.CompilerParams(
            dimension_semantics=("parallel", "parallel"),
            vmem_limit_bytes=48 * 1024 * 1024,
        ),
    )(xw, w2, mask_l, mask_r)

    # (N, E, H*W) -> (N, E, H, W): contiguous (free) reshape, already NCHW.
    return out_flat.reshape(N, E, H, W)


if __name__ == "__main__":
    key = jax.random.PRNGKey(0)
    k_x, k_w = jax.random.split(key)

    # Shapes consistent with the module defaults: in_c=3, embed_dim=48.
    N, C, H, W = 2, 3, 16, 16
    E = 48

    x = jax.random.normal(k_x, (N, C, H, W), dtype=jnp.float32)
    fan_in = C * 3 * 3
    bound = 1.0 / (fan_in ** 0.5)
    weight = jax.random.uniform(k_w, (E, C, 3, 3), dtype=jnp.float32,
                                minval=-bound, maxval=bound)

    # max_tile_elems=128 forces TH=8 -> grid (2, 2), exercising the tiled path.
    out = overlap_patch_embed(x, weight, max_tile_elems=128)
    out = jax.block_until_ready(out)
    assert out.shape == (N, E, H, W)

    # Reference: XLA conv on the same bf16-rounded operands the kernel consumes.
    xq = x.astype(jnp.bfloat16).astype(jnp.float32)
    wq = weight.astype(jnp.bfloat16).astype(jnp.float32)
    ref = lax.conv_general_dilated(
        xq, wq, window_strides=(1, 1), padding="SAME",
        dimension_numbers=("NCHW", "OIHW", "NCHW"),
        precision=lax.Precision.HIGHEST)
    assert jnp.allclose(out, ref, atol=1e-2, rtol=1e-2), \
        float(jnp.max(jnp.abs(out - ref)))

    print("KERNEL_OK")
</pallas_src>

<mosaic_0001>
module attributes {stable_mosaic.version = 11 : i64} {
  func.func @_conv3x3_kernel(%arg0: i32, %arg1: i32, %arg2: memref<1x1x8x162xbf16, #tpu.memory_space<vmem>>, %arg3: memref<48x72xbf16, #tpu.memory_space<vmem>>, %arg4: memref<1x128xbf16, #tpu.memory_space<vmem>>, %arg5: memref<1x128xbf16, #tpu.memory_space<vmem>>, %arg6: memref<1x48x128xf32, #tpu.memory_space<vmem>>, %arg7: memref<72x128xbf16, #tpu.memory_space<vmem>>) attributes {dimension_semantics = [#tpu.dimension_semantics<parallel>, #tpu.dimension_semantics<parallel>], iteration_bounds = array<i64: 2, 2>, scalar_prefetch = 0 : i64, scratch_operands = 1 : i64, tpu.core_type = #tpu.core_type<tc>, window_params = [{transform_indices = @transform_0, window_bounds = array<i64: 1, 1, 8, 162>}, {pipeline_mode = #tpu.pipeline_mode<synchronous>, transform_indices = @transform_1, window_bounds = array<i64: 48, 72>}, {pipeline_mode = #tpu.pipeline_mode<synchronous>, transform_indices = @transform_2, window_bounds = array<i64: 1, 128>}, {pipeline_mode = #tpu.pipeline_mode<synchronous>, transform_indices = @transform_3, window_bounds = array<i64: 1, 128>}, {transform_indices = @transform_4, window_bounds = array<i64: 1, 48, 128>}]} {
    %c0 = arith.constant 0 : index
    %c0_0 = arith.constant 0 : index
    %0 = vector.load %arg4[%c0, %c0_0] : memref<1x128xbf16, #tpu.memory_space<vmem>>, vector<1x128xbf16>
    %c0_1 = arith.constant 0 : index
    %c0_2 = arith.constant 0 : index
    %1 = vector.load %arg5[%c0_1, %c0_2] : memref<1x128xbf16, #tpu.memory_space<vmem>>, vector<1x128xbf16>
    %c0_3 = arith.constant 0 : index
    %c0_4 = arith.constant 0 : index
    %c0_5 = arith.constant 0 : index
    %c0_6 = arith.constant 0 : index
    %2 = vector.load %arg2[%c0_3, %c0_4, %c0_5, %c0_6] : memref<1x1x8x162xbf16, #tpu.memory_space<vmem>>, vector<1x1x8x128xbf16>
    %3 = vector.shape_cast %2 : vector<1x1x8x128xbf16> to vector<8x128xbf16>
    %4 = vector.broadcast %0 : vector<1x128xbf16> to vector<8x128xbf16>
    %5 = arith.mulf %3, %4 : vector<8x128xbf16>
    %c0_7 = arith.constant 0 : index
    %c0_8 = arith.constant 0 : index
    %6 = vector.load %arg7[%c0_7, %c0_8] : memref<72x128xbf16, #tpu.memory_space<vmem>>, vector<8x128xbf16>
    tpu.vector_store %arg7[%c0_7, %c0_8], %5 {strides = array<i32>} : memref<72x128xbf16, #tpu.memory_space<vmem>>, vector<8x128xbf16>,
    %c0_9 = arith.constant 0 : index
    %c0_10 = arith.constant 0 : index
    %c0_11 = arith.constant 0 : index
    %c1 = arith.constant 1 : index
    %7 = vector.load %arg2[%c0_9, %c0_10, %c0_11, %c1] : memref<1x1x8x162xbf16, #tpu.memory_space<vmem>>, vector<1x1x8x128xbf16>
    %8 = vector.shape_cast %7 : vector<1x1x8x128xbf16> to vector<8x128xbf16>
    %c8 = arith.constant 8 : index
    %c0_12 = arith.constant 0 : index
    %9 = vector.load %arg7[%c8, %c0_12] : memref<72x128xbf16, #tpu.memory_space<vmem>>, vector<8x128xbf16>
    tpu.vector_store %arg7[%c8, %c0_12], %8 {strides = array<i32>} : memref<72x128xbf16, #tpu.memory_space<vmem>>, vector<8x128xbf16>,
    %c0_13 = arith.constant 0 : index
    %c0_14 = arith.constant 0 : index
    %c0_15 = arith.constant 0 : index
    %c2 = arith.constant 2 : index
    %10 = vector.load %arg2[%c0_13, %c0_14, %c0_15, %c2] : memref<1x1x8x162xbf16, #tpu.memory_space<vmem>>, vector<1x1x8x128xbf16>
    %11 = vector.shape_cast %10 : vector<1x1x8x128xbf16> to vector<8x128xbf16>
    %12 = vector.broadcast %1 : vector<1x128xbf16> to vector<8x128xbf16>
    %13 = arith.mulf %11, %12 : vector<8x128xbf16>
    %c16 = arith.constant 16 : index
    %c0_16 = arith.constant 0 : index
    %14 = vector.load %arg7[%c16, %c0_16] : memref<72x128xbf16, #tpu.memory_space<vmem>>, vector<8x128xbf16>
    tpu.vector_store %arg7[%c16, %c0_16], %13 {strides = array<i32>} : memref<72x128xbf16, #tpu.memory_space<vmem>>, vector<8x128xbf16>,
    %c0_17 = arith.constant 0 : index
    %c0_18 = arith.constant 0 : index
    %c0_19 = arith.constant 0 : index
    %c16_20 = arith.constant 16 : index
    %15 = vector.load %arg2[%c0_17, %c0_18, %c0_19, %c16_20] : memref<1x1x8x162xbf16, #tpu.memory_space<vmem>>, vector<1x1x8x128xbf16>
    %16 = vector.shape_cast %15 : vector<1x1x8x128xbf16> to vector<8x128xbf16>
    %17 = vector.broadcast %0 : vector<1x128xbf16> to vector<8x128xbf16>
    %18 = arith.mulf %16, %17 : vector<8x128xbf16>
    %c24 = arith.constant 24 : index
    %c0_21 = arith.constant 0 : index
    %19 = vector.load %arg7[%c24, %c0_21] : memref<72x128xbf16, #tpu.memory_space<vmem>>, vector<8x128xbf16>
    tpu.vector_store %arg7[%c24, %c0_21], %18 {strides = array<i32>} : memref<72x128xbf16, #tpu.memory_space<vmem>>, vector<8x128xbf16>,
    %c0_22 = arith.constant 0 : index
    %c0_23 = arith.constant 0 : index
    %c0_24 = arith.constant 0 : index
    %c17 = arith.constant 17 : index
    %20 = vector.load %arg2[%c0_22, %c0_23, %c0_24, %c17] : memref<1x1x8x162xbf16, #tpu.memory_space<vmem>>, vector<1x1x8x128xbf16>
    %21 = vector.shape_cast %20 : vector<1x1x8x128xbf16> to vector<8x128xbf16>
    %c32 = arith.constant 32 : index
    %c0_25 = arith.constant 0 : index
    %22 = vector.load %arg7[%c32, %c0_25] : memref<72x128xbf16, #tpu.memory_space<vmem>>, vector<8x128xbf16>
    tpu.vector_store %arg7[%c32, %c0_25], %21 {strides = array<i32>} : memref<72x128xbf16, #tpu.memory_space<vmem>>, vector<8x128xbf16>,
    %c0_26 = arith.constant 0 : index
    %c0_27 = arith.constant 0 : index
    %c0_28 = arith.constant 0 : index
    %c18 = arith.constant 18 : index
    %23 = vector.load %arg2[%c0_26, %c0_27, %c0_28, %c18] : memref<1x1x8x162xbf16, #tpu.memory_space<vmem>>, vector<1x1x8x128xbf16>
    %24 = vector.shape_cast %23 : vector<1x1x8x128xbf16> to vector<8x128xbf16>
    %25 = vector.broadcast %1 : vector<1x128xbf16> to vector<8x128xbf16>
    %26 = arith.mulf %24, %25 : vector<8x128xbf16>
    %c40 = arith.constant 40 : index
    %c0_29 = arith.constant 0 : index
    %27 = vector.load %arg7[%c40, %c0_29] : memref<72x128xbf16, #tpu.memory_space<vmem>>, vector<8x128xbf16>
    tpu.vector_store %arg7[%c40, %c0_29], %26 {strides = array<i32>} : memref<72x128xbf16, #tpu.memory_space<vmem>>, vector<8x128xbf16>,
    %c0_30 = arith.constant 0 : index
    %c0_31 = arith.constant 0 : index
    %c0_32 = arith.constant 0 : index
    %c32_33 = arith.constant 32 : index
    %28 = vector.load %arg2[%c0_30, %c0_31, %c0_32, %c32_33] : memref<1x1x8x162xbf16, #tpu.memory_space<vmem>>, vector<1x1x8x128xbf16>
    %29 = vector.shape_cast %28 : vector<1x1x8x128xbf16> to vector<8x128xbf16>
    %30 = vector.broadcast %0 : vector<1x128xbf16> to vector<8x128xbf16>
    %31 = arith.mulf %29, %30 : vector<8x128xbf16>
    %c48 = arith.constant 48 : index
    %c0_34 = arith.constant 0 : index
    %32 = vector.load %arg7[%c48, %c0_34] : memref<72x128xbf16, #tpu.memory_space<vmem>>, vector<8x128xbf16>
    tpu.vector_store %arg7[%c48, %c0_34], %31 {strides = array<i32>} : memref<72x128xbf16, #tpu.memory_space<vmem>>, vector<8x128xbf16>,
    %c0_35 = arith.constant 0 : index
    %c0_36 = arith.constant 0 : index
    %c0_37 = arith.constant 0 : index
    %c33 = arith.constant 33 : index
    %33 = vector.load %arg2[%c0_35, %c0_36, %c0_37, %c33] : memref<1x1x8x162xbf16, #tpu.memory_space<vmem>>, vector<1x1x8x128xbf16>
    %34 = vector.shape_cast %33 : vector<1x1x8x128xbf16> to vector<8x128xbf16>
    %c56 = arith.constant 56 : index
    %c0_38 = arith.constant 0 : index
    %35 = vector.load %arg7[%c56, %c0_38] : memref<72x128xbf16, #tpu.memory_space<vmem>>, vector<8x128xbf16>
    tpu.vector_store %arg7[%c56, %c0_38], %34 {strides = array<i32>} : memref<72x128xbf16, #tpu.memory_space<vmem>>, vector<8x128xbf16>,
    %c0_39 = arith.constant 0 : index
    %c0_40 = arith.constant 0 : index
    %c0_41 = arith.constant 0 : index
    %c34 = arith.constant 34 : index
    %36 = vector.load %arg2[%c0_39, %c0_40, %c0_41, %c34] : memref<1x1x8x162xbf16, #tpu.memory_space<vmem>>, vector<1x1x8x128xbf16>
    %37 = vector.shape_cast %36 : vector<1x1x8x128xbf16> to vector<8x128xbf16>
    %38 = vector.broadcast %1 : vector<1x128xbf16> to vector<8x128xbf16>
    %39 = arith.mulf %37, %38 : vector<8x128xbf16>
    %c64 = arith.constant 64 : index
    %c0_42 = arith.constant 0 : index
    %40 = vector.load %arg7[%c64, %c0_42] : memref<72x128xbf16, #tpu.memory_space<vmem>>, vector<8x128xbf16>
    tpu.vector_store %arg7[%c64, %c0_42], %39 {strides = array<i32>} : memref<72x128xbf16, #tpu.memory_space<vmem>>, vector<8x128xbf16>,
    %c0_43 = arith.constant 0 : index
    %c0_44 = arith.constant 0 : index
    %41 = vector.load %arg3[%c0_43, %c0_44] : memref<48x72xbf16, #tpu.memory_space<vmem>>, vector<48x72xbf16>
    %c0_45 = arith.constant 0 : index
    %c0_46 = arith.constant 0 : index
    %42 = vector.load %arg7[%c0_45, %c0_46] : memref<72x128xbf16, #tpu.memory_space<vmem>>, vector<72x128xbf16>
    %cst = arith.constant dense<0.000000e+00> : vector<48x128xf32>
    %43 = tpu.matmul %41, %42, %cst {dimension_numbers = #tpu.dot_dimension_numbers<[1], [0], [0], [1], [0, 0, 1, 1], [], []>} : vector<48x72xbf16>, vector<72x128xbf16>, vector<48x128xf32> -> vector<48x128xf32>
    %c0_47 = arith.constant 0 : index
    %c0_48 = arith.constant 0 : index
    %c0_49 = arith.constant 0 : index
    %44 = vector.load %arg6[%c0_47, %c0_48, %c0_49] : memref<1x48x128xf32, #tpu.memory_space<vmem>>, vector<1x48x128xf32>
    %45 = vector.shape_cast %44 : vector<1x48x128xf32> to vector<48x128xf32>
    %46 = vector.shape_cast %43 : vector<48x128xf32> to vector<1x48x128xf32>
    tpu.vector_store %arg6[%c0_47, %c0_48, %c0_49], %46 {strides = array<i32>} : memref<1x48x128xf32, #tpu.memory_space<vmem>>, vector<1x48x128xf32>,
    return
  }
  func.func @transform_0(%arg0: i32, %arg1: i32) -> (i32, i32, i32, i32) {
    %c0_i32 = arith.constant 0 : i32
    %c0_i32_0 = arith.constant 0 : i32
    %c0_i32_1 = arith.constant 0 : i32
    return %arg0, %arg1, %c0_i32, %c0_i32_0 : i32, i32, i32, i32
  }
  func.func @transform_1(%arg0: i32, %arg1: i32) -> (i32, i32) {
    %c0_i32 = arith.constant 0 : i32
    %c0_i32_0 = arith.constant 0 : i32
    %c0_i32_1 = arith.constant 0 : i32
    return %c0_i32, %c0_i32_0 : i32, i32
  }
  func.func @transform_2(%arg0: i32, %arg1: i32) -> (i32, i32) {
    %c0_i32 = arith.constant 0 : i32
    %c0_i32_0 = arith.constant 0 : i32
    %c0_i32_1 = arith.constant 0 : i32
    return %c0_i32, %c0_i32_0 : i32, i32
  }
  func.func @transform_3(%arg0: i32, %arg1: i32) -> (i32, i32) {
    %c0_i32 = arith.constant 0 : i32
    %c0_i32_0 = arith.constant 0 : i32
    %c0_i32_1 = arith.constant 0 : i32
    return %c0_i32, %c0_i32_0 : i32, i32
  }
  func.func @transform_4(%arg0: i32, %arg1: i32) -> (i32, i32, i32) {
    %c0_i32 = arith.constant 0 : i32
    %c0_i32_0 = arith.constant 0 : i32
    return %arg0, %c0_i32, %arg1 : i32, i32, i32
  }
}

</mosaic_0001>

<llo_original>
// kernel: tpu_custom_call.1
$region0: #{tpu_custom_call.1}
  #allocation0 [shape = 'u32[]', space=smem, size = 0x4, offset = 0x4, fixed_abs, tag = 'smem constant byte address 0x4 - core index']
  #allocation1 [shape = 'u32[144,128]{1,0:T(1,128)}', space=vmem, size = 0x12000, scoped, tag = 'internal scratch']
  #allocation2 [shape = 'bf16[72,128]{1,0:T(8,128)(2,1)}', space=vmem, size = 0x4800, scoped, tag = 'scratch operand']
  %s0 = inlined_call_operand.hbm [shape: bf16[2,2,8,162], index: 0, kind: input, shape index: {}]
  %s1 = inlined_call_operand.hbm [shape: bf16[48,72], index: 1, kind: input, shape index: {}]
  %s2 = inlined_call_operand.vmem [shape: bf16[1,128], index: 2, kind: input, shape index: {}]
  %s3 = inlined_call_operand.vmem [shape: bf16[1,128], index: 3, kind: input, shape index: {}]
  %s4 = inlined_call_operand.hbm [shape: f32[2,48,256], index: 4, kind: output, shape index: {}]
  %s5 = sld [smem:[#allocation0]]
  $region57: #{tpu_custom_call.1} parent=0
    _
  %s7 = ssub.s32 1, %s5
  %s8 = scalar_select 0, %s7, %s5
  $region1: #{tpu_custom_call.1} parent=0
    #allocation3 [shape = 'u8[8192]{0}', space=vmem, size = 0x2000, scoped, tag = 'input window, operand 0']
    #allocation4 [shape = 's32[2]{0}', space=sflag, size = 0x8, scoped, tag = 'scoped memory for tpu_custom_call.1']
    #allocation5 [shape = 's32[2]{0}', space=sflag, size = 0x8, scoped, tag = 'scoped memory for tpu_custom_call.1']
    #allocation6 [shape = 'u8[12288]{0}', space=vmem, size = 0x3000, scoped, tag = 'input window, operand 1, single buffered']
    #allocation7 [shape = 's32[1]{0}', space=sflag, size = 0x4, scoped, tag = 'scoped memory for tpu_custom_call.1']
    #allocation8 [shape = 'u8[49152]{0}', space=vmem, size = 0xc000, scoped, tag = 'output window, operand 0']
    %9 = vsyncpa [#allocation4], 0
    %s10 = scalar_lea.sflag [#allocation4], 1
    %11 = vsyncpa %s10, 0
    %12 = vsyncpa [#allocation7], 0
    %13 = vsyncpa [#allocation5], 0
    %s14 = scalar_lea.sflag [#allocation5], 1
    %15 = vsyncpa %s14, 0
    loop: start=0, step=1, limit=6
    $region2: #{tpu_custom_call.1} parent=1 // loop_pre_header
      _
    $region3: #{tpu_custom_call.1} parent=1 // loop_header
      %s17 = sphi 0, %s21
      %p18 = scmp.ge.s32.totalorder %s17, 6
      %s24 = sphi 0, %s36
      %s25 = sphi 0, %s32
      %s26 = sphi 0, %s24
      %s27 = sphi 0, %s25
      %s28 = sphi 0, %s26
      %s29 = sphi 0, %s27
      %s41 = sphi 0, %s43
      %s44 = sphi 0, %s41
      %s45 = sphi 0, %s44
      %s61 = sphi 0, %s45
      %s65 = sphi 0, %s65
      %s67 = sphi 0, %s65
      %s68 = sphi 0, %s67
      %s82 = sphi 0, %s68
      %s86 = sphi 0, %s86
      %s88 = sphi 0, %s86
      %s89 = sphi 0, %s88
      %s103 = sphi 0, %s89
      %s107 = sphi 0, %s107
      %s109 = sphi 0, %s107
      %s110 = sphi 0, %s109
      %s124 = sphi 0, %s110
      %s132 = sphi 0, %s134
      %s135 = sphi 0, %s132
      %s136 = sphi 0, %s135
      %s152 = sphi 0, %s136
    $region4: #{tpu_custom_call.1} parent=1 // loop_header_branch
      %20 = sbr.rel (%p18) target = $region8
    $region5: #{tpu_custom_call.1} parent=1 // loop_body
      %s22 = ssub.s32 %s17, 1
      %s23 = ssub.s32 %s17, 2
      %s30 = sadd.s32 1, %s25
      %p31 = scmp.ge.s32.totalorder %s30, 2
      %s32 = scalar_select %p31, 0, %s30
      %s33 = sadd.s32 1, %s24
      %s34 = scalar_select %p31, %s33, %s24
      %p35 = scmp.ge.s32.totalorder %s34, 2
      %s36 = scalar_select %p35, 0, %s34
      %s37 = ssub.s32 %s24, %s36
      %s38 = ssub.s32 %s25, %s32
      %s39 = sor.u32 %s37, %s38
      %p40 = scmp.eq.s32.totalorder %s39, 0
      %s42 = sadd.s32 %s41, 1
      %s43 = scalar_select %p40, %s41, %s42
      %p46 = pneg %p40
      %p47 = scmp.eq.s32.totalorder %s17, 3
      %p48 = por %p46, %p47
      %p49 = scmp.ne.s32.totalorder %s41, %s44
      %p50 = scmp.eq.s32.totalorder %s17, 0
      %p51 = por %p49, %p50
      %p52 = scmp.ne.s32.totalorder %s41, %s44
      %p53 = scmp.eq.s32.totalorder %s22, 3
      %p54 = por %p52, %p53
      %p55 = scmp.ne.s32.totalorder %s44, %s45
      %p56 = scmp.eq.s32.totalorder %s22, 0
      %p57 = por %p55, %p56
      %p58 = scmp.ne.s32.totalorder %s44, %s45
      %p59 = scmp.eq.s32.totalorder %s23, 3
      %p60 = por %p58, %p59
      %p62 = scmp.ne.s32.totalorder %s45, %s61
      %p63 = scmp.eq.s32.totalorder %s23, 0
      %p64 = por %p62, %p63
      %s66 = sadd.s32 %s65, 1
      %p69 = scmp.eq.s32.totalorder %s17, 3
      %p70 = scmp.ne.s32.totalorder %s65, %s67
      %p71 = scmp.eq.s32.totalorder %s17, 0
      %p72 = por %p70, %p71
      %p73 = scmp.ne.s32.totalorder %s65, %s67
      %p74 = scmp.eq.s32.totalorder %s22, 3
      %p75 = por %p73, %p74
      %p76 = scmp.ne.s32.totalorder %s67, %s68
      %p77 = scmp.eq.s32.totalorder %s22, 0
      %p78 = por %p76, %p77
      %p79 = scmp.ne.s32.totalorder %s67, %s68
      %p80 = scmp.eq.s32.totalorder %s23, 3
      %p81 = por %p79, %p80
      %p83 = scmp.ne.s32.totalorder %s68, %s82
      %p84 = scmp.eq.s32.totalorder %s23, 0
      %p85 = por %p83, %p84
      %s87 = sadd.s32 %s86, 1
      %p90 = scmp.eq.s32.totalorder %s17, 3
      %p91 = scmp.ne.s32.totalorder %s86, %s88
      %p92 = scmp.eq.s32.totalorder %s17, 0
      %p93 = por %p91, %p92
      %p94 = scmp.ne.s32.totalorder %s86, %s88
      %p95 = scmp.eq.s32.totalorder %s22, 3
      %p96 = por %p94, %p95
      %p97 = scmp.ne.s32.totalorder %s88, %s89
      %p98 = scmp.eq.s32.totalorder %s22, 0
      %p99 = por %p97, %p98
      %p100 = scmp.ne.s32.totalorder %s88, %s89
      %p101 = scmp.eq.s32.totalorder %s23, 3
      %p102 = por %p100, %p101
      %p104 = scmp.ne.s32.totalorder %s89, %s103
      %p105 = scmp.eq.s32.totalorder %s23, 0
      %p106 = por %p104, %p105
      %s108 = sadd.s32 %s107, 1
      %p111 = scmp.eq.s32.totalorder %s17, 3
      %p112 = scmp.ne.s32.totalorder %s107, %s109
      %p113 = scmp.eq.s32.totalorder %s17, 0
      %p114 = por %p112, %p113
      %p115 = scmp.ne.s32.totalorder %s107, %s109
      %p116 = scmp.eq.s32.totalorder %s22, 3
      %p117 = por %p115, %p116
      %p118 = scmp.ne.s32.totalorder %s109, %s110
      %p119 = scmp.eq.s32.totalorder %s22, 0
      %p120 = por %p118, %p119
      %p121 = scmp.ne.s32.totalorder %s109, %s110
      %p122 = scmp.eq.s32.totalorder %s23, 3
      %p123 = por %p121, %p122
      %p125 = scmp.ne.s32.totalorder %s110, %s124
      %p126 = scmp.eq.s32.totalorder %s23, 0
      %p127 = por %p125, %p126
      %s128 = ssub.s32 %s24, %s36
      %s129 = ssub.s32 %s25, %s32
      %s130 = sor.u32 %s128, %s129
      %p131 = scmp.eq.s32.totalorder %s130, 0
      %s133 = sadd.s32 %s132, 1
      %s134 = scalar_select %p131, %s132, %s133
      %p137 = pneg %p131
      %p138 = scmp.eq.s32.totalorder %s17, 3
      %p139 = por %p137, %p138
      %p140 = scmp.ne.s32.totalorder %s132, %s135
      %p141 = scmp.eq.s32.totalorder %s17, 0
      %p142 = por %p140, %p141
      %p143 = scmp.ne.s32.totalorder %s132, %s135
      %p144 = scmp.eq.s32.totalorder %s22, 3
      %p145 = por %p143, %p144
      %p146 = scmp.ne.s32.totalorder %s135, %s136
      %p147 = scmp.eq.s32.totalorder %s22, 0
      %p148 = por %p146, %p147
      %p149 = scmp.ne.s32.totalorder %s135, %s136
      %p150 = scmp.eq.s32.totalorder %s23, 3
      %p151 = por %p149, %p150
      %p153 = scmp.ne.s32.totalorder %s136, %s152
      %p154 = scmp.eq.s32.totalorder %s23, 0
      %p155 = por %p153, %p154
      %p156 = scmp.le.s32.totalorder 1, %s17
      %p157 = scmp.lt.s32.totalorder %s17, 5
      %p158 = pnand %p156, %p157
      %p159 = pneg %p158
      // Predicated region
      $region9: #{tpu_custom_call.1} parent=5 // pred_check
        _
      $region10: #{tpu_custom_call.1} parent=5 // pred_check_branch
        %161 = sbr.rel (%p158) target = $region12
      $region11: #{tpu_custom_call.1} parent=5 // pred_region
        %s162 = ssub.s32 %s17, 1
        // Predicated region
        $region13: #{tpu_custom_call.1} parent=11 // pred_check
          %p163 = pneg %p78
        $region14: #{tpu_custom_call.1} parent=11 // pred_check_branch
          %165 = sbr.rel (%p163) target = $region16
        $region15: #{tpu_custom_call.1} parent=11 // pred_region
          %s167 = ssub.s32 384, 384
          %168 = vsyncadd [#allocation7], %s167
          %s169 = sshll.u32 [#allocation6], 4
          %s170 = int_to_ptr.vmem [resolvable:$true] %s169
          %175 = dma.hbm_to_vmem [thread:$0]  %s1, 384, %s170, [#allocation7], 64, 64, 4
        $region16: #{tpu_custom_call.1} parent=11 // pred_fallthru
          _
        // Predicated region
        $region17: #{tpu_custom_call.1} parent=11 // pred_check
          %p176 = pneg %p99
        $region18: #{tpu_custom_call.1} parent=11 // pred_check_branch
          %178 = sbr.rel (%p176) target = $region20
        $region19: #{tpu_custom_call.1} parent=11 // pred_region
          _
        $region20: #{tpu_custom_call.1} parent=11 // pred_fallthru
          _
        // Predicated region
        $region21: #{tpu_custom_call.1} parent=11 // pred_check
          %p179 = pneg %p120
        $region22: #{tpu_custom_call.1} parent=11 // pred_check_branch
          %181 = sbr.rel (%p179) target = $region24
        $region23: #{tpu_custom_call.1} parent=11 // pred_region
          _
        $region24: #{tpu_custom_call.1} parent=11 // pred_fallthru
          _
      $region12: #{tpu_custom_call.1} parent=5 // pred_fallthru
        _
      %p182 = scmp.lt.s32.totalorder %s17, 4
      // Predicated region
      $region25: #{tpu_custom_call.1} parent=5 // pred_check
        %p183 = pneg %p182
      $region26: #{tpu_custom_call.1} parent=5 // pred_check_branch
        %185 = sbr.rel (%p183) target = $region28
      $region27: #{tpu_custom_call.1} parent=5 // pred_region
        // Predicated region
        $region29: #{tpu_custom_call.1} parent=27 // pred_check
          %p186 = pneg %p51
        $region30: #{tpu_custom_call.1} parent=27 // pred_check_branch
          %188 = sbr.rel (%p186) target = $region32
        $region31: #{tpu_custom_call.1} parent=27 // pred_region
          %s189 = sand.u32 %s41, 1
          %s190 = scalar_lea.sflag [#allocation4], %s189
          %s191 = sand.u32 %s41, 1
          %s192 = smul.addr %s191, 8
          %s193 = scalar_lea.vmem [#allocation3], %s192
          %s195 = ssub.s32 128, 128
          %196 = vsyncadd %s190, %s195
          %s197 = smul.addr %s25, 2
          %s198 = smul.addr %s24, 4
          %s199 = sadd.s32 %s197, %s198
          %s200 = smul.addr %s199, 64
          %s201 = scalar_lea.hbm %s0, %s200
          %s203 = sshll.u32 %s193, 4
          %s204 = int_to_ptr.vmem [resolvable:$true] %s203
          %206 = dma.hbm_to_vmem [thread:$0]  %s201, 128, %s204, %s190
        $region32: #{tpu_custom_call.1} parent=27 // pred_fallthru
          _
      $region28: #{tpu_custom_call.1} parent=5 // pred_fallthru
        _
      %p207 = scmp.le.s32.totalorder 1, %s17
      %p208 = scmp.lt.s32.totalorder %s17, 5
      %p209 = pnand %p207, %p208
      %p210 = pneg %p209
      // Predicated region
      $region33: #{tpu_custom_call.1} parent=5 // pred_check
        _
      $region34: #{tpu_custom_call.1} parent=5 // pred_check_branch
        %212 = sbr.rel (%p209) target = $region36
      $region35: #{tpu_custom_call.1} parent=5 // pred_region
        %s213 = ssub.s32 %s17, 1
        %s214 = sand.u32 %s44, 1
        %s215 = scalar_lea.sflag [#allocation4], %s214
        %s216 = sand.u32 %s44, 1
        %s217 = smul.addr %s216, 8
        %s218 = scalar_lea.vmem [#allocation3], %s217
        // Predicated region
        $region37: #{tpu_custom_call.1} parent=35 // pred_check
          %p219 = pneg %p57
        $region38: #{tpu_custom_call.1} parent=35 // pred_check_branch
          %221 = sbr.rel (%p219) target = $region40
        $region39: #{tpu_custom_call.1} parent=35 // pred_region
          %222 = dma.done %s215, 128
        $region40: #{tpu_custom_call.1} parent=35 // pred_fallthru
          _
        // Predicated region
        $region41: #{tpu_custom_call.1} parent=35 // pred_check
          %p223 = pneg %p78
        $region42: #{tpu_custom_call.1} parent=35 // pred_check_branch
          %225 = sbr.rel (%p223) target = $region44
        $region43: #{tpu_custom_call.1} parent=35 // pred_region
          %226 = dma.done [#allocation7], 384
        $region44: #{tpu_custom_call.1} parent=35 // pred_fallthru
          _
        %s227 = sand.u32 %s44, 1
        %s228 = scalar_lea.sflag [#allocation4], %s227
        %s229 = sand.u32 %s44, 1
        %s230 = smul.addr %s229, 8
        %s231 = scalar_lea.vmem [#allocation3], %s230
        %p232 = pneg %p57
        %p233 = pneg %p54
        %p234 = pneg %p78
        %p235 = pneg %p75
        %p236 = pneg %p99
        %p237 = pneg %p96
        %p238 = pneg %p120
        %p239 = pneg %p117
        %p240 = pneg %p148
        %p241 = pneg %p145
        %s242 = sand.u32 %s135, 1
        %s243 = scalar_lea.sflag [#allocation5], %s242
        %s244 = sand.u32 %s135, 1
        %s245 = smul.addr %s244, 48
        %s246 = scalar_lea.vmem [#allocation8], %s245
        %v248 = vld [vmem:[%s2] sm:$0x1]
        %v249 = vld [vmem:[%s3] sm:$0x1]
        %v250 = vld [vmem:[%s218] sm:$0xf]
        %v252 = vpack.i.b16 %v248, %v248
        %v254 = vlaneseq
        %v255 = vshrl.u32 %v254, 7
        %v256 = vsub.s32 0, %v255
        %v257 = vrot.slane %v252, %v256
        %v258 = vmul.bf16 %v250, %v257
        %259 = vst [vmem:[#allocation2] sm:$0xf] %v258
        %v260 = vld [vmem:[%s218] sm:$0xff]
        %262 = vrot.lane.b32.xlu0 %v260, 127
        %v263 = vpop.permute.xlu0 %262
        %v264 = vrot.slane %v263, 4
        %vm265 = vcmask 1039360
        %v266 = vsel %vm265, %v263, %v264
        %268 = vst [vmem:[#allocation2 + $0x4] sm:$0xf] %v266
        %v269 = vld [vmem:[%s218] sm:$0xff]
        %v271 = vpack.i.b16 %v249, %v249
        %v273 = vlaneseq
        %v274 = vshrl.u32 %v273, 7
        %v275 = vsub.s32 0, %v274
        %v276 = vrot.slane %v271, %v275
        %v278 = vunpack.c.l.b16 %v276
        %v279 = vpack.c.b16 %v278, %v278
        %280 = vrot.lane.b32.xlu0 %v279, 2
        %v281 = vpop.permute.xlu0 %280
        %v282 = vrot.slane %v281, 4
        %vm283 = vcmask 15360
        %v284 = vsel %vm283, %v282, %v281
        %v286 = vmul.bf16 %v269, %v284
        %288 = vrot.lane.b32.xlu0 %v286, 126
        %v289 = vpop.permute.xlu0 %288
        %v290 = vrot.slane %v289, 4
        %vm291 = vcmask 1031168
        %v292 = vsel %vm291, %v289, %v290
        %294 = vst [vmem:[#allocation2 + $0x8] sm:$0xf] %v292
        %v295 = vld [vmem:[%s218] sm:$0xff]
        %v297 = vunpack.c.l.b16 %v257
        %v298 = vpack.c.b16 %v297, %v297
        %299 = vrot.lane.b32.xlu0 %v298, 16
        %v300 = vpop.permute.xlu0 %299
        %v301 = vrot.slane %v300, 4
        %vm302 = vcmask 130048
        %v303 = vsel %vm302, %v301, %v300
        %v305 = vmul.bf16 %v295, %v303
        %307 = vrot.lane.b32.xlu0 %v305, 112
        %v308 = vpop.permute.xlu0 %307
        %v309 = vrot.slane %v308, 4
        %vm310 = vcmask 916480
        %v311 = vsel %vm310, %v308, %v309
        %313 = vst [vmem:[#allocation2 + $0xc] sm:$0xf] %v311
        %v314 = vld [vmem:[%s218] sm:$0xff]
        %316 = vrot.lane.b32.xlu0 %v314, 111
        %v317 = vpop.permute.xlu0 %316
        %v318 = vrot.slane %v317, 4
        %vm319 = vcmask 908288
        %v320 = vsel %vm319, %v317, %v318
        %322 = vst [vmem:[#allocation2 + $0x10] sm:$0xf] %v320
        %v323 = vld [vmem:[%s218] sm:$0xff]
        %324 = vrot.lane.b32.xlu0 %v279, 18
        %v325 = vpop.permute.xlu0 %324
        %v326 = vrot.slane %v325, 4
        %vm327 = vcmask 146432
        %v328 = vsel %vm327, %v326, %v325
        %v330 = vmul.bf16 %v323, %v328
        %332 = vrot.lane.b32.xlu0 %v330, 110
        %v333 = vpop.permute.xlu0 %332
        %v334 = vrot.slane %v333, 4
        %vm335 = vcmask 900096
        %v336 = vsel %vm335, %v333, %v334
        %338 = vst [vmem:[#allocation2 + $0x14] sm:$0xf] %v336
        %v339 = vld [vmem:[%s218] sm:$0xff]
        %340 = vrot.lane.b32.xlu0 %v298, 32
        %v341 = vpop.permute.xlu0 %340
        %v342 = vrot.slane %v341, 4
        %vm343 = vcmask 261120
        %v344 = vsel %vm343, %v342, %v341
        %v346 = vmul.bf16 %v339, %v344
        %348 = vrot.lane.b32.xlu0 %v346, 96
        %v349 = vpop.permute.xlu0 %348
        %v350 = vrot.slane %v349, 4
        %vm351 = vcmask 785408
        %v352 = vsel %vm351, %v349, %v350
        %354 = vst [vmem:[#allocation2 + $0x18] sm:$0xf] %v352
        %v355 = vld [vmem:[%s218] sm:$0xff]
        %357 = vrot.lane.b32.xlu0 %v355, 95
        %v358 = vpop.permute.xlu0 %357
        %v359 = vrot.slane %v358, 4
        %vm360 = vcmask 777216
        %v361 = vsel %vm360, %v358, %v359
        %363 = vst [vmem:[#allocation2 + $0x1c] sm:$0xf] %v361
        %v364 = vld [vmem:[%s218] sm:$0xff]
        %365 = vrot.lane.b32.xlu0 %v279, 34
        %v366 = vpop.permute.xlu0 %365
        %v367 = vrot.slane %v366, 4
        %vm368 = vcmask 277504
        %v369 = vsel %vm368, %v367, %v366
        %v371 = vmul.bf16 %v364, %v369
        %373 = vrot.lane.b32.xlu0 %v371, 94
        %v374 = vpop.permute.xlu0 %373
        %v375 = vrot.slane %v374, 4
        %vm376 = vcmask 769024
        %v377 = vsel %vm376, %v374, %v375
        %379 = vst [vmem:[#allocation2 + $0x20] sm:$0xf] %v377
        %v380 = vld [vmem:[#allocation6] sm:$0xf]
        %v381 = vld [vmem:[#allocation6 + $0x4] sm:$0xf]
        %v382 = vld [vmem:[#allocation6 + $0x8] sm:$0xf]
        %v383 = vld [vmem:[#allocation6 + $0xc] sm:$0xf]
        %v384 = vld [vmem:[#allocation6 + $0x10] sm:$0xf]
        %v385 = vld [vmem:[#allocation6 + $0x14] sm:$0xf]
        %v386 = vld [vmem:[#allocation2] sm:$0xf]
        %v387 = vld [vmem:[#allocation2 + $0x4] sm:$0xf]
        %v388 = vld [vmem:[#allocation2 + $0x8] sm:$0xf]
        %v389 = vld [vmem:[#allocation2 + $0xc] sm:$0xf]
        %v390 = vld [vmem:[#allocation2 + $0x10] sm:$0xf]
        %v391 = vld [vmem:[#allocation2 + $0x14] sm:$0xf]
        %v392 = vld [vmem:[#allocation2 + $0x18] sm:$0xf]
        %v393 = vld [vmem:[#allocation2 + $0x1c] sm:$0xf]
        %v394 = vld [vmem:[#allocation2 + $0x20] sm:$0xf]
        %v401 = vunpack.c.l.b16 %v380
        %v402 = vunpack.c.l.b16 %v381
        %v403 = vunpack.c.l.b16 %v382
        %v404 = vunpack.c.l.b16 %v383
        %v405 = vunpack.c.l.b16 %v384
        %v406 = vunpack.c.l.b16 %v385
        %v407 = vpack.c.b16 %v402, %v401
        %v408 = vpack.c.b16 %v404, %v403
        %v409 = vpack.c.b16 %v406, %v405
        %v419 = vunpack.c.l.b16 %v386
        %v420 = vunpack.c.l.b16 %v387
        %v421 = vunpack.c.l.b16 %v388
        %v422 = vunpack.c.l.b16 %v389
        %v423 = vunpack.c.l.b16 %v390
        %v424 = vunpack.c.l.b16 %v391
        %v425 = vunpack.c.l.b16 %v392
        %v426 = vunpack.c.l.b16 %v393
        %v427 = vunpack.c.l.b16 %v394
        %v428 = vpack.c.b16 %v420, %v419
        %v429 = vpack.c.b16 %v422, %v421
        %v430 = vpack.c.b16 %v424, %v423
        %v431 = vpack.c.b16 %v426, %v425
        %v432 = vpack.c.b16 %v427, %v427
        %vm437 = vcmask 588800
        %v439 = vsel %vm437, %v407, 0
        %v442 = vsel %vm437, %v408, 0
        %v445 = vsel %vm437, %v409, 0
        %vm447 = vcmask 1043456
        %v449 = vsel %vm447, %v432, 0
        %451 = vmatprep.subr.bf16.mxu0 0
        %452 = vmatpush1.bf16.msra.mxu0 0
        %453 = vmatprep.subr.bf16.mxu0 0
        %454 = vmatpush1.bf16.msra.mxu0 0
        %455 = vmatprep.subr.bf16.mxu0 0
        %456 = vmatpush1.bf16.msra.mxu0 0
        %457 = vmatprep.subr.bf16.mxu0 0
        %458 = vmatpush1.bf16.msra.mxu0 %v449
        %459 = vmatprep.subr.bf16.mxu0 0
        %460 = vmatpush1.bf16.msra.mxu0 %v431
        %461 = vmatprep.subr.bf16.mxu0 0
        %462 = vmatpush1.bf16.msra.mxu0 %v430
        %463 = vmatprep.subr.bf16.mxu0 0
        %464 = vmatpush1.bf16.msra.mxu0 %v429
        %465 = vmatprep.subr.bf16.mxu0 0
        %466 = vmatpush1.bf16.msra.mxu0 %v428
        %467 = vmatprep.subr.bf16.mxu0 0
        %468 = vmatpush2.bf16.msra.mxu0 0
        %469 = vmatprep.subr.bf16.mxu0 0
        %470 = vmatpush2.bf16.msra.mxu0 0
        %471 = vmatprep.subr.bf16.mxu0 0
        %472 = vmatpush2.bf16.msra.mxu0 0
        %473 = vmatprep.subr.bf16.mxu0 0
        %474 = vmatpush2.bf16.msra.mxu0 0
        %475 = vmatprep.subr.bf16.mxu0 0
        %476 = vmatpush2.bf16.msra.mxu0 0
        %477 = vmatprep.subr.bf16.mxu0 0
        %478 = vmatpush2.bf16.msra.mxu0 0
        %479 = vmatprep.subr.bf16.mxu0 0
        %480 = vmatpush2.bf16.msra.mxu0 0
        %481 = vmatprep.subr.bf16.mxu0 0
        %482 = vmatpush2.bf16.msra.mxu0 0
        %483 = vmatprep.mubr.bf16.mxu0 0
        %484 = vmatmul.mubr.bf16.gmra.mxu0 %v439
        %v485 = vpop.f32.mrf.mxu0
        %v486 = vadd.f32 0.0, %v485
        %v487 = vpop.f32.mrf.mxu0
        %v488 = vpop.f32.mrf.mxu0
        %v489 = vadd.f32 0.0, %v488
        %v490 = vpop.f32.mrf.mxu0
        %491 = vmatprep.mubr.bf16.mxu0 0
        %492 = vmatmul.mubr.bf16.gmra.mxu0 %v442
        %v493 = vpop.f32.mrf.mxu0
        %v494 = vadd.f32 0.0, %v493
        %v495 = vpop.f32.mrf.mxu0
        %v496 = vpop.f32.mrf.mxu0
        %v497 = vadd.f32 0.0, %v496
        %v498 = vpop.f32.mrf.mxu0
        %499 = vmatprep.mubr.bf16.mxu0 0
        %500 = vmatmul.mubr.bf16.gmra.mxu0 %v445
        %v501 = vpop.f32.mrf.mxu0
        %v502 = vadd.f32 0.0, %v501
        %v503 = vpop.f32.mrf.mxu0
        %v504 = vpop.f32.mrf.mxu0
        %v505 = vadd.f32 0.0, %v504
        %v506 = vpop.f32.mrf.mxu0
        %507 = vdwg.mxu0
        %508 = vst [vmem:[%s246] sm:$0xff] %v486
        %509 = vst [vmem:[%s246 + $0x8] sm:$0xff] %v489
        %510 = vst [vmem:[%s246 + $0x10] sm:$0xff] %v494
        %511 = vst [vmem:[%s246 + $0x18] sm:$0xff] %v497
        %512 = vst [vmem:[%s246 + $0x20] sm:$0xff] %v502
        %513 = vst [vmem:[%s246 + $0x28] sm:$0xff] %v505
        %s514 = sand.u32 %s135, 1
        %s515 = scalar_lea.sflag [#allocation5], %s514
        %s516 = sand.u32 %s135, 1
        %s517 = smul.addr %s516, 48
        %s518 = scalar_lea.vmem [#allocation8], %s517
        // Predicated region
        $region45: #{tpu_custom_call.1} parent=35 // pred_check
          %p519 = pneg %p145
        $region46: #{tpu_custom_call.1} parent=35 // pred_check_branch
          %521 = sbr.rel (%p519) target = $region48
        $region47: #{tpu_custom_call.1} parent=35 // pred_region
          %s523 = ssub.s32 768, 768
          %524 = vsyncadd %s515, %s523
          %s525 = smul.addr %s26, 12
          %s526 = sadd.s32 %s27, %s525
          %s527 = smul.addr %s526, 128
          %s528 = scalar_lea.hbm %s4, %s527
          %s529 = sshll.u32 %s518, 4
          %s530 = int_to_ptr.vmem [resolvable:$true] %s529
          %535 = dma.vmem_to_hbm [thread:$0]  %s530, 768, %s528, %s515, 128, 256, 8
        $region48: #{tpu_custom_call.1} parent=35 // pred_fallthru
          _
      $region36: #{tpu_custom_call.1} parent=5 // pred_fallthru
        _
      %p536 = scmp.le.s32.totalorder 2, %s17
      // Predicated region
      $region49: #{tpu_custom_call.1} parent=5 // pred_check
        %p537 = pneg %p536
      $region50: #{tpu_custom_call.1} parent=5 // pred_check_branch
        %539 = sbr.rel (%p537) target = $region52
      $region51: #{tpu_custom_call.1} parent=5 // pred_region
        %s540 = ssub.s32 %s17, 2
        // Predicated region
        $region53: #{tpu_custom_call.1} parent=51 // pred_check
          %p541 = pneg %p151
        $region54: #{tpu_custom_call.1} parent=51 // pred_check_branch
          %543 = sbr.rel (%p541) target = $region56
        $region55: #{tpu_custom_call.1} parent=51 // pred_region
          %s544 = sand.u32 %s136, 1
          %s545 = scalar_lea.sflag [#allocation5], %s544
          %s546 = sand.u32 %s136, 1
          %s547 = smul.addr %s546, 48
          %s548 = scalar_lea.vmem [#allocation8], %s547
          %549 = dma.done %s545, 768
        $region56: #{tpu_custom_call.1} parent=51 // pred_fallthru
          _
      $region52: #{tpu_custom_call.1} parent=5 // pred_fallthru
        _
    $region6: #{tpu_custom_call.1} parent=1 // loop_footer
      %s21 = sadd.s32 1, %s17
    $region7: #{tpu_custom_call.1} parent=1 // loop_footer_branch
      %16 = sbr.rel target = $region3
    $region8: #{tpu_custom_call.1} parent=1 // loop_exit
      _
    %550 = vsyncpa [#allocation4], 1
    %s551 = scalar_lea.sflag [#allocation4], 1
    %552 = vsyncpa %s551, 1
    %553 = vsyncpa [#allocation7], 1
    %554 = vsyncpa [#allocation5], 1
    %s555 = scalar_lea.sflag [#allocation5], 1
    %556 = vsyncpa %s555, 1

</llo_original>
